<compile_context>
chip_gen: v6e
topology: v6e:2x2x1
jax: 0.10.0
libtpu: 0.0.40
codegen_flags: <defaults>
</compile_context>

<pallas_src>
import jax
import jax.numpy as jnp
from jax.experimental import pallas as pl
from jax.experimental.pallas import tpu as pltpu

BN_EPS = 1e-5
LANE = 128
MAX_TILE_HW = 32768      # max lane extent per step (fp32: x 1 MiB + out 4 MiB, x2 buffered)
MAX_BATCH_BLOCK = 16     # max images folded into one grid step when HW is small


def _pick_tile_hw(hw: int) -> int:
    """Largest legal HW tile: full HW if it fits, else a multiple-of-128 divisor."""
    if hw <= MAX_TILE_HW:
        return hw
    t = (MAX_TILE_HW // LANE) * LANE
    while t >= LANE:
        if hw % t == 0:
            return t
        t -= LANE
    return hw  # fallback: full-extent blocks are always layout-legal


def _pick_batch_block(n: int, hw: int) -> int:
    """Largest (capped) divisor of N such that one grid step still moves several MiB."""
    nb = 1
    for d in range(1, min(n, MAX_BATCH_BLOCK) + 1):
        if n % d == 0 and d * hw <= MAX_TILE_HW:
            nb = d
    return nb


def _vmem_limit_bytes() -> int:
    """Scoped VMEM limit: ~3/4 of this generation's capacity (48 MiB on v7x's 64 MiB)."""
    try:
        cap = int(pltpu.get_tpu_info().vmem_capacity_bytes)
    except Exception:
        cap = 64 * 1024 * 1024
    return max(32 * 1024 * 1024, min((cap * 3) // 4, 96 * 1024 * 1024))


# ---------------- Pallas kernels ----------------

def stats_kernel(x_ref, gram_ref, xsum_ref):
    """Accumulate Gram G += x @ x^T and per-channel row-sums of x over HW tiles (MXU-only)."""
    @pl.when(pl.program_id(1) == 0)
    def _():
        gram_ref[...] = jnp.zeros_like(gram_ref)
        xsum_ref[...] = jnp.zeros_like(xsum_ref)

    g = jnp.zeros(gram_ref.shape, jnp.float32)
    s = jnp.zeros(xsum_ref.shape, jnp.float32)
    for b in range(x_ref.shape[0]):                     # static unroll over the batch block
        x = x_ref[b]                                    # (Cin, tile_hw)
        g = g + jax.lax.dot_general(                    # x @ x^T on the MXU
            x, x, dimension_numbers=(((1,), (1,)), ((), ())),
            preferred_element_type=jnp.float32)         # (Cin, Cin)
        s = s + jnp.sum(x, axis=1, keepdims=True)       # (Cin, 1) -- tiny XLU reduce
    gram_ref[...] += g
    xsum_ref[...] += s


def map_kernel(x_ref, w_ref, shift_ref, o_ref):
    """out = relu(w_scaled @ x + shift); BN affine + skip-doubling folded into w/shift."""
    w = w_ref[...]                                      # (Cexp, Cin), hoisted out of the loop
    shift = shift_ref[...]                              # (Cexp, 1)
    for b in range(x_ref.shape[0]):                     # static unroll over the batch block
        y = jnp.dot(w, x_ref[b], preferred_element_type=jnp.float32)   # (Cexp, tile_hw)
        o_ref[b] = jnp.maximum(y + shift, 0.0).astype(o_ref.dtype)


# ---------------- wrapper ----------------

@jax.jit
def bottleneck_forward(x_nchw, w1_t, w2_t, w3_t, g1, b1, g2, b2, g3, b3):
    """x_nchw: (N, Cin, H, W) float32; weights in PyTorch layouts.

    w1_t/w2_t/g1/b1/g2/b2 are accepted for interface fidelity with the module
    but are dead code in the reference forward (their branch results are
    overwritten before use), so they are neither computed nor DMA'd.
    """
    del w1_t, w2_t, g1, b1, g2, b2   # dead branches in the reference forward

    N, Cin, H, W = x_nchw.shape
    Cexp = w3_t.shape[0]
    HW = H * W
    M = N * HW

    # free layout view: (N, Cin, HW) with HW on the 128-lane axis -- no transpose, no pad
    x3 = x_nchw.reshape(N, Cin, HW).astype(jnp.float32)

    tile_hw = _pick_tile_hw(HW)
    num_hw_tiles = HW // tile_hw
    nb = _pick_batch_block(N, HW)        # >1 only when tile_hw == HW (small spatial sizes)
    NB = N // nb

    vmem_limit = _vmem_limit_bytes()
    cparams_acc = pltpu.CompilerParams(
        dimension_semantics=("parallel", "arbitrary"), vmem_limit_bytes=vmem_limit)
    cparams_par = pltpu.CompilerParams(
        dimension_semantics=("parallel", "parallel"), vmem_limit_bytes=vmem_limit)

    # ---- pass 1: per-batch-block partial Gram / row-sum of x (reads x once, MXU-only) ----
    gram_p, xsum_p = pl.pallas_call(
        stats_kernel,
        out_shape=(jax.ShapeDtypeStruct((NB, Cin, Cin), jnp.float32),
                   jax.ShapeDtypeStruct((NB, Cin, 1), jnp.float32)),
        grid_spec=pltpu.PrefetchScalarGridSpec(
            num_scalar_prefetch=0,
            grid=(NB, num_hw_tiles),
            in_specs=[pl.BlockSpec((nb, Cin, tile_hw), lambda i, j: (i, 0, j))],
            out_specs=(pl.BlockSpec((None, Cin, Cin), lambda i, j: (i, 0, 0)),
                       pl.BlockSpec((None, Cin, 1), lambda i, j: (i, 0, 0)))),
        compiler_params=cparams_acc,
    )(x3)

    # ---- recover BN batch stats of y3 = cnn3(x) from the tiny Gram / row-sum ----
    gram = jnp.sum(gram_p, axis=0)                      # (Cin, Cin) = sum_m x x^T
    xsum = jnp.sum(xsum_p, axis=0)                      # (Cin, 1)   = sum_m x
    w3t = w3_t[:, :, 0, 0].astype(jnp.float32)          # (Cexp, Cin) == W3^T
    ysum = w3t @ xsum                                   # (Cexp, 1)  = sum_m y
    ysq = jnp.sum((w3t @ gram) * w3t, axis=1, keepdims=True)   # (Cexp, 1) = sum_m y^2
    mean = ysum / M
    var = ysq / M - mean * mean                         # biased variance (train-mode BN)
    inv = jax.lax.rsqrt(var + BN_EPS)

    # fold BN affine + `out += skip(out)` (skip = Identity => x2) into weights/shift:
    #   2*((y - mean)*inv*g + b) = (w3t * 2*g*inv) @ x + 2*(b - mean*g*inv)
    g3c = g3.reshape(Cexp, 1).astype(jnp.float32)
    b3c = b3.reshape(Cexp, 1).astype(jnp.float32)
    scale = 2.0 * g3c * inv
    shift = 2.0 * (b3c - mean * g3c * inv)
    w3t_scaled = w3t * scale                            # one-time (Cexp, Cin) multiply

    # ---- pass 2: pipelined per-tile map: relu(w_scaled @ x + shift) ----
    out3 = pl.pallas_call(
        map_kernel,
        out_shape=jax.ShapeDtypeStruct((N, Cexp, HW), jnp.float32),
        grid_spec=pltpu.PrefetchScalarGridSpec(
            num_scalar_prefetch=0,
            grid=(NB, num_hw_tiles),
            in_specs=[pl.BlockSpec((nb, Cin, tile_hw), lambda i, j: (i, 0, j)),
                      pl.BlockSpec((Cexp, Cin), lambda i, j: (0, 0)),
                      pl.BlockSpec((Cexp, 1), lambda i, j: (0, 0))],
            out_specs=pl.BlockSpec((nb, Cexp, tile_hw), lambda i, j: (i, 0, j))),
        compiler_params=cparams_par,
    )(x3, w3t_scaled, shift)

    return out3.reshape(N, Cexp, H, W)                  # free reshape back to NCHW


def _reference_forward(x_nchw, w3_t, g3, b3):
    """Pure-JAX reference of what the PyTorch forward actually returns."""
    N, Cin, H, W = x_nchw.shape
    Cexp = w3_t.shape[0]
    x2d = jnp.transpose(x_nchw, (0, 2, 3, 1)).reshape(-1, Cin)
    y = x2d @ jnp.transpose(w3_t[:, :, 0, 0], (1, 0))
    mean = jnp.mean(y, axis=0, keepdims=True)
    var = jnp.mean(jnp.square(y - mean), axis=0, keepdims=True)
    y = (y - mean) / jnp.sqrt(var + BN_EPS) * g3 + b3
    y = jnp.maximum(y + y, 0.0)
    return jnp.transpose(y.reshape(N, H, W, Cexp), (0, 3, 1, 2))


if __name__ == "__main__":
    # Small shapes implied by the forward: in_channels must equal out_channels.
    N, C, H, W = 2, 8, 16, 16
    expansion = 4
    Cexp = C * expansion

    key = jax.random.PRNGKey(0)
    ks = jax.random.split(key, 10)

    x = jax.random.normal(ks[0], (N, C, H, W), jnp.float32)

    # Conv weights in PyTorch (Cout, Cin, kH, kW) layout.
    w1_t = 0.1 * jax.random.normal(ks[1], (C, C, 1, 1), jnp.float32)       # cnn1 (dead)
    w2_t = 0.1 * jax.random.normal(ks[2], (C, C, 3, 3), jnp.float32)       # cnn2 (dead)
    w3_t = 0.1 * jax.random.normal(ks[3], (Cexp, C, 1, 1), jnp.float32)    # cnn3

    # BatchNorm affine params (randomized deterministically to exercise broadcasting).
    g1 = 1.0 + 0.1 * jax.random.normal(ks[4], (C,), jnp.float32)
    b1 = 0.1 * jax.random.normal(ks[5], (C,), jnp.float32)
    g2 = 1.0 + 0.1 * jax.random.normal(ks[6], (C,), jnp.float32)
    b2 = 0.1 * jax.random.normal(ks[7], (C,), jnp.float32)
    g3 = 1.0 + 0.1 * jax.random.normal(ks[8], (Cexp,), jnp.float32)
    b3 = 0.1 * jax.random.normal(ks[9], (Cexp,), jnp.float32)

    out = bottleneck_forward(x, w1_t, w2_t, w3_t, g1, b1, g2, b2, g3, b3)
    out = jax.block_until_ready(out)

    assert out.shape == (N, Cexp, H, W), out.shape

    ref = _reference_forward(x, w3_t, g3, b3)
    max_err = float(jnp.max(jnp.abs(out - ref)))
    assert jnp.allclose(out, ref, atol=2e-4, rtol=2e-4), max_err

    print("KERNEL_OK")
</pallas_src>

<mosaic_0001>
module attributes {stable_mosaic.version = 11 : i64} {
  func.func @stats_kernel(%arg0: i32, %arg1: i32, %arg2: memref<2x8x256xf32, #tpu.memory_space<vmem>>, %arg3: memref<1x8x8xf32, #tpu.memory_space<vmem>>, %arg4: memref<1x8x1xf32, #tpu.memory_space<vmem>>) attributes {dimension_semantics = [#tpu.dimension_semantics<parallel>, #tpu.dimension_semantics<arbitrary>], iteration_bounds = array<i64: 1, 1>, scalar_prefetch = 0 : i64, scratch_operands = 0 : i64, tpu.core_type = #tpu.core_type<tc>, window_params = [{transform_indices = @transform_0, window_bounds = array<i64: 2, 8, 256>}, {transform_indices = @transform_1, window_bounds = array<i64: 1, 8, 8>}, {transform_indices = @transform_2, window_bounds = array<i64: 1, 8, 1>}]} {
    %c0_i32 = arith.constant 0 : i32
    %0 = arith.cmpi eq, %arg1, %c0_i32 : i32
    %1 = arith.extui %0 : i1 to i32
    %c0_i32_0 = arith.constant 0 : i32
    %2 = arith.cmpi ne, %1, %c0_i32_0 : i32
    scf.if %2 {
      %cst_22 = arith.constant 0.000000e+00 : f32
      %31 = vector.broadcast %cst_22 : f32 to vector<8x8xf32>
      %c0_23 = arith.constant 0 : index
      %c0_24 = arith.constant 0 : index
      %c0_25 = arith.constant 0 : index
      %32 = vector.load %arg3[%c0_23, %c0_24, %c0_25] : memref<1x8x8xf32, #tpu.memory_space<vmem>>, vector<1x8x8xf32>
      %33 = vector.shape_cast %32 : vector<1x8x8xf32> to vector<8x8xf32>
      %34 = vector.shape_cast %31 : vector<8x8xf32> to vector<1x8x8xf32>
      tpu.vector_store %arg3[%c0_23, %c0_24, %c0_25], %34 {strides = array<i32>} : memref<1x8x8xf32, #tpu.memory_space<vmem>>, vector<1x8x8xf32>,
      %cst_26 = arith.constant 0.000000e+00 : f32
      %35 = vector.broadcast %cst_26 : f32 to vector<8x1xf32>
      %c0_27 = arith.constant 0 : index
      %c0_28 = arith.constant 0 : index
      %c0_29 = arith.constant 0 : index
      %36 = vector.load %arg4[%c0_27, %c0_28, %c0_29] : memref<1x8x1xf32, #tpu.memory_space<vmem>>, vector<1x8x1xf32>
      %37 = vector.shape_cast %36 : vector<1x8x1xf32> to vector<8x1xf32>
      %38 = vector.shape_cast %35 : vector<8x1xf32> to vector<1x8x1xf32>
      tpu.vector_store %arg4[%c0_27, %c0_28, %c0_29], %38 {strides = array<i32>} : memref<1x8x1xf32, #tpu.memory_space<vmem>>, vector<1x8x1xf32>,
    } else {
    }
    %cst = arith.constant 0.000000e+00 : f32
    %3 = vector.broadcast %cst : f32 to vector<8x8xf32>
    %cst_1 = arith.constant 0.000000e+00 : f32
    %4 = vector.broadcast %cst_1 : f32 to vector<8x1xf32>
    %c0 = arith.constant 0 : index
    %c0_2 = arith.constant 0 : index
    %c0_3 = arith.constant 0 : index
    %5 = vector.load %arg2[%c0, %c0_2, %c0_3] : memref<2x8x256xf32, #tpu.memory_space<vmem>>, vector<1x8x256xf32>
    %6 = vector.shape_cast %5 : vector<1x8x256xf32> to vector<8x256xf32>
    %cst_4 = arith.constant dense<0.000000e+00> : vector<8x8xf32>
    %7 = tpu.matmul %6, %6, %cst_4 {dimension_numbers = #tpu.dot_dimension_numbers<[1], [1], [0], [0], [0, 0, 1, 0], [], []>} : vector<8x256xf32>, vector<8x256xf32>, vector<8x8xf32> -> vector<8x8xf32>
    %8 = arith.addf %3, %7 : vector<8x8xf32>
    %cst_5 = arith.constant dense<0.000000e+00> : vector<8xf32>
    %9 = vector.multi_reduction <add>, %6, %cst_5 [1] : vector<8x256xf32> to vector<8xf32>
    %10 = vector.shape_cast %9 : vector<8xf32> to vector<8x1xf32>
    %11 = arith.addf %4, %10 : vector<8x1xf32>
    %c1 = arith.constant 1 : index
    %c0_6 = arith.constant 0 : index
    %c0_7 = arith.constant 0 : index
    %12 = vector.load %arg2[%c1, %c0_6, %c0_7] : memref<2x8x256xf32, #tpu.memory_space<vmem>>, vector<1x8x256xf32>
    %13 = vector.shape_cast %12 : vector<1x8x256xf32> to vector<8x256xf32>
    %cst_8 = arith.constant dense<0.000000e+00> : vector<8x8xf32>
    %14 = tpu.matmul %13, %13, %cst_8 {dimension_numbers = #tpu.dot_dimension_numbers<[1], [1], [0], [0], [0, 0, 1, 0], [], []>} : vector<8x256xf32>, vector<8x256xf32>, vector<8x8xf32> -> vector<8x8xf32>
    %15 = arith.addf %8, %14 : vector<8x8xf32>
    %cst_9 = arith.constant dense<0.000000e+00> : vector<8xf32>
    %16 = vector.multi_reduction <add>, %13, %cst_9 [1] : vector<8x256xf32> to vector<8xf32>
    %17 = vector.shape_cast %16 : vector<8xf32> to vector<8x1xf32>
    %18 = arith.addf %11, %17 : vector<8x1xf32>
    %c0_10 = arith.constant 0 : index
    %c0_11 = arith.constant 0 : index
    %c0_12 = arith.constant 0 : index
    %19 = vector.load %arg3[%c0_10, %c0_11, %c0_12] : memref<1x8x8xf32, #tpu.memory_space<vmem>>, vector<1x8x8xf32>
    %20 = vector.shape_cast %19 : vector<1x8x8xf32> to vector<8x8xf32>
    %21 = arith.addf %20, %15 : vector<8x8xf32>
    %c0_13 = arith.constant 0 : index
    %c0_14 = arith.constant 0 : index
    %c0_15 = arith.constant 0 : index
    %22 = vector.load %arg3[%c0_13, %c0_14, %c0_15] : memref<1x8x8xf32, #tpu.memory_space<vmem>>, vector<1x8x8xf32>
    %23 = vector.shape_cast %22 : vector<1x8x8xf32> to vector<8x8xf32>
    %24 = vector.shape_cast %21 : vector<8x8xf32> to vector<1x8x8xf32>
    tpu.vector_store %arg3[%c0_13, %c0_14, %c0_15], %24 {strides = array<i32>} : memref<1x8x8xf32, #tpu.memory_space<vmem>>, vector<1x8x8xf32>,
    %c0_16 = arith.constant 0 : index
    %c0_17 = arith.constant 0 : index
    %c0_18 = arith.constant 0 : index
    %25 = vector.load %arg4[%c0_16, %c0_17, %c0_18] : memref<1x8x1xf32, #tpu.memory_space<vmem>>, vector<1x8x1xf32>
    %26 = vector.shape_cast %25 : vector<1x8x1xf32> to vector<8x1xf32>
    %27 = arith.addf %26, %18 : vector<8x1xf32>
    %c0_19 = arith.constant 0 : index
    %c0_20 = arith.constant 0 : index
    %c0_21 = arith.constant 0 : index
    %28 = vector.load %arg4[%c0_19, %c0_20, %c0_21] : memref<1x8x1xf32, #tpu.memory_space<vmem>>, vector<1x8x1xf32>
    %29 = vector.shape_cast %28 : vector<1x8x1xf32> to vector<8x1xf32>
    %30 = vector.shape_cast %27 : vector<8x1xf32> to vector<1x8x1xf32>
    tpu.vector_store %arg4[%c0_19, %c0_20, %c0_21], %30 {strides = array<i32>} : memref<1x8x1xf32, #tpu.memory_space<vmem>>, vector<1x8x1xf32>,
    return
  }
  func.func @transform_0(%arg0: i32, %arg1: i32) -> (i32, i32, i32) {
    %c0_i32 = arith.constant 0 : i32
    %c0_i32_0 = arith.constant 0 : i32
    return %arg0, %c0_i32, %arg1 : i32, i32, i32
  }
  func.func @transform_1(%arg0: i32, %arg1: i32) -> (i32, i32, i32) {
    %c0_i32 = arith.constant 0 : i32
    %c0_i32_0 = arith.constant 0 : i32
    %c0_i32_1 = arith.constant 0 : i32
    return %arg0, %c0_i32, %c0_i32_0 : i32, i32, i32
  }
  func.func @transform_2(%arg0: i32, %arg1: i32) -> (i32, i32, i32) {
    %c0_i32 = arith.constant 0 : i32
    %c0_i32_0 = arith.constant 0 : i32
    %c0_i32_1 = arith.constant 0 : i32
    return %arg0, %c0_i32, %c0_i32_0 : i32, i32, i32
  }
}

module attributes {stable_mosaic.version = 11 : i64} {
  func.func @map_kernel(%arg0: i32, %arg1: i32, %arg2: memref<2x8x256xf32, #tpu.memory_space<vmem>>, %arg3: memref<32x8xf32, #tpu.memory_space<vmem>>, %arg4: memref<32x1xf32, #tpu.memory_space<vmem>>, %arg5: memref<2x32x256xf32, #tpu.memory_space<vmem>>) attributes {dimension_semantics = [#tpu.dimension_semantics<parallel>, #tpu.dimension_semantics<parallel>], iteration_bounds = array<i64: 1, 1>, scalar_prefetch = 0 : i64, scratch_operands = 0 : i64, tpu.core_type = #tpu.core_type<tc>, window_params = [{transform_indices = @transform_0, window_bounds = array<i64: 2, 8, 256>}, {pipeline_mode = #tpu.pipeline_mode<synchronous>, transform_indices = @transform_1, window_bounds = array<i64: 32, 8>}, {pipeline_mode = #tpu.pipeline_mode<synchronous>, transform_indices = @transform_2, window_bounds = array<i64: 32, 1>}, {transform_indices = @transform_3, window_bounds = array<i64: 2, 32, 256>}]} {
    %c0 = arith.constant 0 : index
    %c0_0 = arith.constant 0 : index
    %0 = vector.load %arg3[%c0, %c0_0] : memref<32x8xf32, #tpu.memory_space<vmem>>, vector<32x8xf32>
    %c0_1 = arith.constant 0 : index
    %c0_2 = arith.constant 0 : index
    %1 = vector.load %arg4[%c0_1, %c0_2] : memref<32x1xf32, #tpu.memory_space<vmem>>, vector<32x1xf32>
    %c0_3 = arith.constant 0 : index
    %c0_4 = arith.constant 0 : index
    %c0_5 = arith.constant 0 : index
    %2 = vector.load %arg2[%c0_3, %c0_4, %c0_5] : memref<2x8x256xf32, #tpu.memory_space<vmem>>, vector<1x8x256xf32>
    %3 = vector.shape_cast %2 : vector<1x8x256xf32> to vector<8x256xf32>
    %cst = arith.constant dense<0.000000e+00> : vector<32x256xf32>
    %4 = tpu.matmul %0, %3, %cst {dimension_numbers = #tpu.dot_dimension_numbers<[1], [0], [0], [1], [0, 0, 1, 1], [], []>} : vector<32x8xf32>, vector<8x256xf32>, vector<32x256xf32> -> vector<32x256xf32>
    %5 = vector.broadcast %1 : vector<32x1xf32> to vector<32x256xf32>
    %6 = arith.addf %4, %5 : vector<32x256xf32>
    %cst_6 = arith.constant 0.000000e+00 : f32
    %7 = vector.broadcast %cst_6 : f32 to vector<32x256xf32>
    %8 = arith.maximumf %6, %7 : vector<32x256xf32>
    %c0_7 = arith.constant 0 : index
    %c0_8 = arith.constant 0 : index
    %c0_9 = arith.constant 0 : index
    %9 = vector.load %arg5[%c0_7, %c0_8, %c0_9] : memref<2x32x256xf32, #tpu.memory_space<vmem>>, vector<1x32x256xf32>
    %10 = vector.shape_cast %9 : vector<1x32x256xf32> to vector<32x256xf32>
    %11 = vector.shape_cast %8 : vector<32x256xf32> to vector<1x32x256xf32>
    tpu.vector_store %arg5[%c0_7, %c0_8, %c0_9], %11 {strides = array<i32>} : memref<2x32x256xf32, #tpu.memory_space<vmem>>, vector<1x32x256xf32>,
    %c1 = arith.constant 1 : index
    %c0_10 = arith.constant 0 : index
    %c0_11 = arith.constant 0 : index
    %12 = vector.load %arg2[%c1, %c0_10, %c0_11] : memref<2x8x256xf32, #tpu.memory_space<vmem>>, vector<1x8x256xf32>
    %13 = vector.shape_cast %12 : vector<1x8x256xf32> to vector<8x256xf32>
    %cst_12 = arith.constant dense<0.000000e+00> : vector<32x256xf32>
    %14 = tpu.matmul %0, %13, %cst_12 {dimension_numbers = #tpu.dot_dimension_numbers<[1], [0], [0], [1], [0, 0, 1, 1], [], []>} : vector<32x8xf32>, vector<8x256xf32>, vector<32x256xf32> -> vector<32x256xf32>
    %15 = vector.broadcast %1 : vector<32x1xf32> to vector<32x256xf32>
    %16 = arith.addf %14, %15 : vector<32x256xf32>
    %cst_13 = arith.constant 0.000000e+00 : f32
    %17 = vector.broadcast %cst_13 : f32 to vector<32x256xf32>
    %18 = arith.maximumf %16, %17 : vector<32x256xf32>
    %c1_14 = arith.constant 1 : index
    %c0_15 = arith.constant 0 : index
    %c0_16 = arith.constant 0 : index
    %19 = vector.load %arg5[%c1_14, %c0_15, %c0_16] : memref<2x32x256xf32, #tpu.memory_space<vmem>>, vector<1x32x256xf32>
    %20 = vector.shape_cast %19 : vector<1x32x256xf32> to vector<32x256xf32>
    %21 = vector.shape_cast %18 : vector<32x256xf32> to vector<1x32x256xf32>
    tpu.vector_store %arg5[%c1_14, %c0_15, %c0_16], %21 {strides = array<i32>} : memref<2x32x256xf32, #tpu.memory_space<vmem>>, vector<1x32x256xf32>,
    return
  }
  func.func @transform_0(%arg0: i32, %arg1: i32) -> (i32, i32, i32) {
    %c0_i32 = arith.constant 0 : i32
    %c0_i32_0 = arith.constant 0 : i32
    return %arg0, %c0_i32, %arg1 : i32, i32, i32
  }
  func.func @transform_1(%arg0: i32, %arg1: i32) -> (i32, i32) {
    %c0_i32 = arith.constant 0 : i32
    %c0_i32_0 = arith.constant 0 : i32
    %c0_i32_1 = arith.constant 0 : i32
    return %c0_i32, %c0_i32_0 : i32, i32
  }
  func.func @transform_2(%arg0: i32, %arg1: i32) -> (i32, i32) {
    %c0_i32 = arith.constant 0 : i32
    %c0_i32_0 = arith.constant 0 : i32
    %c0_i32_1 = arith.constant 0 : i32
    return %c0_i32, %c0_i32_0 : i32, i32
  }
  func.func @transform_3(%arg0: i32, %arg1: i32) -> (i32, i32, i32) {
    %c0_i32 = arith.constant 0 : i32
    %c0_i32_0 = arith.constant 0 : i32
    return %arg0, %c0_i32, %arg1 : i32, i32, i32
  }
}

</mosaic_0001>

<llo_original>
// kernel: bottleneck_forward.2
$region0: #{bottleneck_forward.2}
  #allocation0 [shape = 'u32[]', space=smem, size = 0x4, offset = 0x4, fixed_abs, tag = 'smem constant byte address 0x4 - core index']
  #allocation1 [shape = 'u32[144,128]{1,0:T(1,128)}', space=vmem, size = 0x12000, scoped, tag = 'internal scratch']
  %s0 = inlined_call_operand.vmem [shape: f32[2,8,256], index: 0, kind: input, shape index: {}]
  %s1 = inlined_call_operand.vmem [shape: f32[1,8,8], index: 1, kind: output, shape index: {0}]
  %s2 = inlined_call_operand.vmem [shape: f32[1,8,1], index: 2, kind: output, shape index: {1}]
  %3 = xla_tuple %s1, %s2
  %s4 = sld [smem:[#allocation0]]
  $region26: #{bottleneck_forward.2} parent=0
    _
  %s6 = ssub.s32 1, %s4
  %s7 = scalar_select 0, %s6, %s4
  // Predicated region
  $region2: #{bottleneck_forward.2} parent=0 // pred_check
    _
  $region3: #{bottleneck_forward.2} parent=0 // pred_check_branch
    %9 = sbr.rel (0) target = $region5
  $region4: #{bottleneck_forward.2} parent=0 // pred_region
    _
  $region5: #{bottleneck_forward.2} parent=0 // pred_fallthru
    _
  %p10 = scmp.eq.s32.totalorder 0, 0
  // Predicated region
  $region6: #{bottleneck_forward.2} parent=0 // pred_check
    %p11 = pneg %p10
  $region7: #{bottleneck_forward.2} parent=0 // pred_check_branch
    %13 = sbr.rel (%p11) target = $region9
  $region8: #{bottleneck_forward.2} parent=0 // pred_region
    %vm14 = vcmask 64512
    %15 = vst.msk [vmem:[%s1] sm:$0xff] %vm14, 0.0
    %vm16 = vcmask 7168
    %17 = vst.msk [vmem:[%s2] sm:$0xff] %vm16, 0.0
  $region9: #{bottleneck_forward.2} parent=0 // pred_fallthru
    _
  %v18 = vld [vmem:[%s0] sm:$0xff]
  %v19 = vld [vmem:[%s0 + $0x8] sm:$0xff]
  %v20 = vadd.f32 %v18, %v19
  %21 = vadd.xlane.f32.xlu0 %v20
  %v22 = vpop.xlane.xlu0 %21
  %v23 = vadd.f32 %v22, 0.0
  %s24 = scalar_lea.vmem %s0, 16
  %v25 = vld [vmem:[%s24] sm:$0xff]
  %v26 = vld [vmem:[%s24 + $0x8] sm:$0xff]
  %27 = vmatprep.subr.mxu0 0.0
  %28 = vmatpush1.xpose.msra.mxu0 0.0
  %29 = vmatprep.subr.mxu0 0.0
  %30 = vmatpush1.xpose.msra.mxu0 0.0
  %31 = vmatprep.subr.mxu0 0.0
  %32 = vmatpush1.xpose.msra.mxu0 0.0
  %33 = vmatprep.subr.mxu0 0.0
  %34 = vmatpush1.xpose.msra.mxu0 0.0
  %35 = vmatprep.subr.mxu0 0.0
  %36 = vmatpush1.xpose.msra.mxu0 0.0
  %37 = vmatprep.subr.mxu0 0.0
  %38 = vmatpush1.xpose.msra.mxu0 0.0
  %39 = vmatprep.subr.mxu0 0.0
  %40 = vmatpush1.xpose.msra.mxu0 0.0
  %41 = vmatprep.subr.mxu0 0.0
  %42 = vmatpush1.xpose.msra.mxu0 0.0
  %43 = vmatprep.subr.mxu0 0.0
  %44 = vmatpush1.xpose.msra.mxu0 0.0
  %45 = vmatprep.subr.mxu0 0.0
  %46 = vmatpush1.xpose.msra.mxu0 0.0
  %47 = vmatprep.subr.mxu0 0.0
  %48 = vmatpush1.xpose.msra.mxu0 0.0
  %49 = vmatprep.subr.mxu0 0.0
  %50 = vmatpush1.xpose.msra.mxu0 0.0
  %51 = vmatprep.subr.mxu0 0.0
  %52 = vmatpush1.xpose.msra.mxu0 0.0
  %53 = vmatprep.subr.mxu0 0.0
  %54 = vmatpush1.xpose.msra.mxu0 0.0
  %55 = vmatprep.subr.mxu0 0.0
  %56 = vmatpush1.xpose.msra.mxu0 0.0
  %57 = vmatprep.subr.mxu0 %v26
  %58 = vmatpush1.xpose.msra.mxu0 %v25
  %59 = vmatprep.subr.mxu0 0.0
  %60 = vmatpush2.xpose.msra.mxu0 0.0
  %61 = vmatprep.subr.mxu0 0.0
  %62 = vmatpush2.xpose.msra.mxu0 0.0
  %63 = vmatprep.subr.mxu0 0.0
  %64 = vmatpush2.xpose.msra.mxu0 0.0
  %65 = vmatprep.subr.mxu0 0.0
  %66 = vmatpush2.xpose.msra.mxu0 0.0
  %67 = vmatprep.subr.mxu0 0.0
  %68 = vmatpush2.xpose.msra.mxu0 0.0
  %69 = vmatprep.subr.mxu0 0.0
  %70 = vmatpush2.xpose.msra.mxu0 0.0
  %71 = vmatprep.subr.mxu0 0.0
  %72 = vmatpush2.xpose.msra.mxu0 0.0
  %73 = vmatprep.subr.mxu0 0.0
  %74 = vmatpush2.xpose.msra.mxu0 0.0
  %75 = vmatprep.subr.mxu0 0.0
  %76 = vmatpush2.xpose.msra.mxu0 0.0
  %77 = vmatprep.subr.mxu0 0.0
  %78 = vmatpush2.xpose.msra.mxu0 0.0
  %79 = vmatprep.subr.mxu0 0.0
  %80 = vmatpush2.xpose.msra.mxu0 0.0
  %81 = vmatprep.subr.mxu0 0.0
  %82 = vmatpush2.xpose.msra.mxu0 0.0
  %83 = vmatprep.subr.mxu0 0.0
  %84 = vmatpush2.xpose.msra.mxu0 0.0
  %85 = vmatprep.subr.mxu0 0.0
  %86 = vmatpush2.xpose.msra.mxu0 0.0
  %87 = vmatprep.subr.mxu0 0.0
  %88 = vmatpush2.xpose.msra.mxu0 0.0
  %89 = vmatprep.subr.mxu0 0.0
  %90 = vmatpush2.xpose.msra.mxu0 0.0
  %91 = vmatprep.mubr.f32.mxu0 %v26
  %92 = vmatmul.mubr.f32.gmra.mxu0 %v25
  %v93 = vpop.f32.mrf.mxu0
  %v94 = vadd.f32 0.0, %v93
  %v95 = vpop.f32.mrf.mxu0
  %96 = vdwg.mxu0
  %97 = vmatprep.subr.mxu0 0.0
  %98 = vmatpush1.xpose.msra.mxu0 0.0
  %99 = vmatprep.subr.mxu0 0.0
  %100 = vmatpush1.xpose.msra.mxu0 0.0
  %101 = vmatprep.subr.mxu0 0.0
  %102 = vmatpush1.xpose.msra.mxu0 0.0
  %103 = vmatprep.subr.mxu0 0.0
  %104 = vmatpush1.xpose.msra.mxu0 0.0
  %105 = vmatprep.subr.mxu0 0.0
  %106 = vmatpush1.xpose.msra.mxu0 0.0
  %107 = vmatprep.subr.mxu0 0.0
  %108 = vmatpush1.xpose.msra.mxu0 0.0
  %109 = vmatprep.subr.mxu0 0.0
  %110 = vmatpush1.xpose.msra.mxu0 0.0
  %111 = vmatprep.subr.mxu0 0.0
  %112 = vmatpush1.xpose.msra.mxu0 0.0
  %113 = vmatprep.subr.mxu0 0.0
  %114 = vmatpush1.xpose.msra.mxu0 0.0
  %115 = vmatprep.subr.mxu0 0.0
  %116 = vmatpush1.xpose.msra.mxu0 0.0
  %117 = vmatprep.subr.mxu0 0.0
  %118 = vmatpush1.xpose.msra.mxu0 0.0
  %119 = vmatprep.subr.mxu0 0.0
  %120 = vmatpush1.xpose.msra.mxu0 0.0
  %121 = vmatprep.subr.mxu0 0.0
  %122 = vmatpush1.xpose.msra.mxu0 0.0
  %123 = vmatprep.subr.mxu0 0.0
  %124 = vmatpush1.xpose.msra.mxu0 0.0
  %125 = vmatprep.subr.mxu0 0.0
  %126 = vmatpush1.xpose.msra.mxu0 0.0
  %127 = vmatprep.subr.mxu0 %v19
  %128 = vmatpush1.xpose.msra.mxu0 %v18
  %129 = vmatprep.subr.mxu0 0.0
  %130 = vmatpush2.xpose.msra.mxu0 0.0
  %131 = vmatprep.subr.mxu0 0.0
  %132 = vmatpush2.xpose.msra.mxu0 0.0
  %133 = vmatprep.subr.mxu0 0.0
  %134 = vmatpush2.xpose.msra.mxu0 0.0
  %135 = vmatprep.subr.mxu0 0.0
  %136 = vmatpush2.xpose.msra.mxu0 0.0
  %137 = vmatprep.subr.mxu0 0.0
  %138 = vmatpush2.xpose.msra.mxu0 0.0
  %139 = vmatprep.subr.mxu0 0.0
  %140 = vmatpush2.xpose.msra.mxu0 0.0
  %141 = vmatprep.subr.mxu0 0.0
  %142 = vmatpush2.xpose.msra.mxu0 0.0
  %143 = vmatprep.subr.mxu0 0.0
  %144 = vmatpush2.xpose.msra.mxu0 0.0
  %145 = vmatprep.subr.mxu0 0.0
  %146 = vmatpush2.xpose.msra.mxu0 0.0
  %147 = vmatprep.subr.mxu0 0.0
  %148 = vmatpush2.xpose.msra.mxu0 0.0
  %149 = vmatprep.subr.mxu0 0.0
  %150 = vmatpush2.xpose.msra.mxu0 0.0
  %151 = vmatprep.subr.mxu0 0.0
  %152 = vmatpush2.xpose.msra.mxu0 0.0
  %153 = vmatprep.subr.mxu0 0.0
  %154 = vmatpush2.xpose.msra.mxu0 0.0
  %155 = vmatprep.subr.mxu0 0.0
  %156 = vmatpush2.xpose.msra.mxu0 0.0
  %157 = vmatprep.subr.mxu0 0.0
  %158 = vmatpush2.xpose.msra.mxu0 0.0
  %159 = vmatprep.subr.mxu0 0.0
  %160 = vmatpush2.xpose.msra.mxu0 0.0
  %161 = vmatprep.mubr.f32.mxu0 %v19
  %162 = vmatmul.mubr.f32.gmra.mxu0 %v18
  %v163 = vpop.f32.mrf.mxu0
  %v164 = vadd.f32 %v94, %v163
  %v165 = vpop.f32.mrf.mxu0
  %166 = vdwg.mxu0
  %v167 = vadd.f32 %v25, %v26
  %168 = vadd.xlane.f32.xlu0 %v167
  %v169 = vpop.xlane.xlu0 %168
  %v170 = vadd.f32 %v23, %v169
  %v171 = vld [vmem:[%s1] sm:$0xff]
  %v172 = vadd.f32 %v171, %v164
  %vm173 = vcmask 64512
  %174 = vst.msk [vmem:[%s1] sm:$0xff] %vm173, %v172
  %v175 = vld [vmem:[%s2] sm:$0xff]
  %v176 = vadd.f32 %v175, %v170
  %vm177 = vcmask 7168
  %178 = vst.msk [vmem:[%s2] sm:$0xff] %vm177, %v176
  // Predicated region
  $region10: #{bottleneck_forward.2} parent=0 // pred_check
    _
  $region11: #{bottleneck_forward.2} parent=0 // pred_check_branch
    %180 = sbr.rel (0) target = $region13
  $region12: #{bottleneck_forward.2} parent=0 // pred_region
    _
  $region13: #{bottleneck_forward.2} parent=0 // pred_fallthru
    _
  // Predicated region
  $region14: #{bottleneck_forward.2} parent=0 // pred_check
    _
  $region15: #{bottleneck_forward.2} parent=0 // pred_check_branch
    %182 = sbr.rel (0) target = $region17
  $region16: #{bottleneck_forward.2} parent=0 // pred_region
    _
  $region17: #{bottleneck_forward.2} parent=0 // pred_fallthru
    _
  // Predicated region
  $region18: #{bottleneck_forward.2} parent=0 // pred_check
    _
  $region19: #{bottleneck_forward.2} parent=0 // pred_check_branch
    %184 = sbr.rel (0) target = $region21
  $region20: #{bottleneck_forward.2} parent=0 // pred_region
    _
  $region21: #{bottleneck_forward.2} parent=0 // pred_fallthru
    _
  // Predicated region
  $region22: #{bottleneck_forward.2} parent=0 // pred_check
    _
  $region23: #{bottleneck_forward.2} parent=0 // pred_check_branch
    %186 = sbr.rel (0) target = $region25
  $region24: #{bottleneck_forward.2} parent=0 // pred_region
    _
  $region25: #{bottleneck_forward.2} parent=0 // pred_fallthru
    _

// kernel: bottleneck_forward.3
$region0: #{bottleneck_forward.3}
  #allocation0 [shape = 'u32[]', space=smem, size = 0x4, offset = 0x4, fixed_abs, tag = 'smem constant byte address 0x4 - core index']
  #allocation1 [shape = 'u32[144,128]{1,0:T(1,128)}', space=vmem, size = 0x12000, scoped, tag = 'internal scratch']
  %s0 = inlined_call_operand.vmem [shape: f32[2,8,256], index: 0, kind: input, shape index: {}]
  %s1 = inlined_call_operand.vmem [shape: f32[32,8], index: 1, kind: input, shape index: {}]
  %s2 = inlined_call_operand.vmem [shape: f32[32,1], index: 2, kind: input, shape index: {}]
  %s3 = inlined_call_operand.vmem [shape: f32[2,32,256], index: 3, kind: output, shape index: {}]
  %s4 = sld [smem:[#allocation0]]
  $region22: #{bottleneck_forward.3} parent=0
    _
  %s6 = ssub.s32 1, %s4
  %s7 = scalar_select 0, %s6, %s4
  // Predicated region
  $region2: #{bottleneck_forward.3} parent=0 // pred_check
    _
  $region3: #{bottleneck_forward.3} parent=0 // pred_check_branch
    %9 = sbr.rel (0) target = $region5
  $region4: #{bottleneck_forward.3} parent=0 // pred_region
    _
  $region5: #{bottleneck_forward.3} parent=0 // pred_fallthru
    _
  // Predicated region
  $region6: #{bottleneck_forward.3} parent=0 // pred_check
    _
  $region7: #{bottleneck_forward.3} parent=0 // pred_check_branch
    %11 = sbr.rel (0) target = $region9
  $region8: #{bottleneck_forward.3} parent=0 // pred_region
    _
  $region9: #{bottleneck_forward.3} parent=0 // pred_fallthru
    _
  // Predicated region
  $region10: #{bottleneck_forward.3} parent=0 // pred_check
    _
  $region11: #{bottleneck_forward.3} parent=0 // pred_check_branch
    %13 = sbr.rel (0) target = $region13
  $region12: #{bottleneck_forward.3} parent=0 // pred_region
    _
  $region13: #{bottleneck_forward.3} parent=0 // pred_fallthru
    _
  %v14 = vld [vmem:[%s1] sm:$0xff]
  %v15 = vld [vmem:[%s1 + $0x8] sm:$0xff]
  %v16 = vld [vmem:[%s1 + $0x10] sm:$0xff]
  %v17 = vld [vmem:[%s1 + $0x18] sm:$0xff]
  %v18 = vld [vmem:[%s2] sm:$0xff]
  %v19 = vld [vmem:[%s2 + $0x8] sm:$0xff]
  %v20 = vld [vmem:[%s2 + $0x10] sm:$0xff]
  %v21 = vld [vmem:[%s2 + $0x18] sm:$0xff]
  %v22 = vld [vmem:[%s0] sm:$0xff]
  %v23 = vld [vmem:[%s0 + $0x8] sm:$0xff]
  %25 = vset.pattern.permute.xlu0 0
  %26 = vperm.xlu0 %25, %v18
  %v27 = vpop.permute.xlu0 %26
  %30 = vset.pattern.permute.xlu0 0
  %31 = vperm.xlu0 %30, %v19
  %v32 = vpop.permute.xlu0 %31
  %35 = vset.pattern.permute.xlu0 0
  %36 = vperm.xlu0 %35, %v20
  %v37 = vpop.permute.xlu0 %36
  %40 = vset.pattern.permute.xlu0 0
  %41 = vperm.xlu0 %40, %v21
  %v42 = vpop.permute.xlu0 %41
  %vm44 = vcmask 64512
  %v46 = vsel %vm44, %v14, 0
  %v49 = vsel %vm44, %v15, 0
  %v52 = vsel %vm44, %v16, 0
  %v55 = vsel %vm44, %v17, 0
  %57 = vmatprep.subr.mxu0 0.0
  %58 = vmatpush1.msra.mxu0 0.0
  %59 = vmatprep.subr.mxu0 0.0
  %60 = vmatpush1.msra.mxu0 0.0
  %61 = vmatprep.subr.mxu0 0.0
  %62 = vmatpush1.msra.mxu0 0.0
  %63 = vmatprep.subr.mxu0 0.0
  %64 = vmatpush1.msra.mxu0 0.0
  %65 = vmatprep.subr.mxu0 0.0
  %66 = vmatpush1.msra.mxu0 0.0
  %67 = vmatprep.subr.mxu0 0.0
  %68 = vmatpush1.msra.mxu0 0.0
  %69 = vmatprep.subr.mxu0 0.0
  %70 = vmatpush1.msra.mxu0 0.0
  %71 = vmatprep.subr.mxu0 0.0
  %72 = vmatpush1.msra.mxu0 0.0
  %73 = vmatprep.subr.mxu0 0.0
  %74 = vmatpush1.msra.mxu0 0.0
  %75 = vmatprep.subr.mxu0 0.0
  %76 = vmatpush1.msra.mxu0 0.0
  %77 = vmatprep.subr.mxu0 0.0
  %78 = vmatpush1.msra.mxu0 0.0
  %79 = vmatprep.subr.mxu0 0.0
  %80 = vmatpush1.msra.mxu0 0.0
  %81 = vmatprep.subr.mxu0 0.0
  %82 = vmatpush1.msra.mxu0 0.0
  %83 = vmatprep.subr.mxu0 0.0
  %84 = vmatpush1.msra.mxu0 0.0
  %85 = vmatprep.subr.mxu0 0.0
  %86 = vmatpush1.msra.mxu0 0.0
  %87 = vmatprep.subr.mxu0 %v23
  %88 = vmatpush1.msra.mxu0 %v22
  %89 = vmatprep.subr.mxu0 0.0
  %90 = vmatpush2.msra.mxu0 0.0
  %91 = vmatprep.subr.mxu0 0.0
  %92 = vmatpush2.msra.mxu0 0.0
  %93 = vmatprep.subr.mxu0 0.0
  %94 = vmatpush2.msra.mxu0 0.0
  %95 = vmatprep.subr.mxu0 0.0
  %96 = vmatpush2.msra.mxu0 0.0
  %97 = vmatprep.subr.mxu0 0.0
  %98 = vmatpush2.msra.mxu0 0.0
  %99 = vmatprep.subr.mxu0 0.0
  %100 = vmatpush2.msra.mxu0 0.0
  %101 = vmatprep.subr.mxu0 0.0
  %102 = vmatpush2.msra.mxu0 0.0
  %103 = vmatprep.subr.mxu0 0.0
  %104 = vmatpush2.msra.mxu0 0.0
  %105 = vmatprep.subr.mxu0 0.0
  %106 = vmatpush2.msra.mxu0 0.0
  %107 = vmatprep.subr.mxu0 0.0
  %108 = vmatpush2.msra.mxu0 0.0
  %109 = vmatprep.subr.mxu0 0.0
  %110 = vmatpush2.msra.mxu0 0.0
  %111 = vmatprep.subr.mxu0 0.0
  %112 = vmatpush2.msra.mxu0 0.0
  %113 = vmatprep.subr.mxu0 0.0
  %114 = vmatpush2.msra.mxu0 0.0
  %115 = vmatprep.subr.mxu0 0.0
  %116 = vmatpush2.msra.mxu0 0.0
  %117 = vmatprep.subr.mxu0 0.0
  %118 = vmatpush2.msra.mxu0 0.0
  %119 = vmatprep.subr.mxu0 0.0
  %120 = vmatpush2.msra.mxu0 0.0
  %121 = vmatprep.mubr.f32.mxu0 0.0
  %122 = vmatmul.mubr.f32.gmra.mxu0 %v46
  %v123 = vpop.f32.mrf.mxu0
  %v124 = vadd.f32 %v27, %v123
  %v125 = vpop.f32.mrf.mxu0
  %v126 = vadd.f32 %v27, %v125
  %127 = vmatprep.mubr.f32.mxu0 0.0
  %128 = vmatmul.mubr.f32.gmra.mxu0 %v49
  %v129 = vpop.f32.mrf.mxu0
  %v130 = vadd.f32 %v32, %v129
  %v131 = vpop.f32.mrf.mxu0
  %v132 = vadd.f32 %v32, %v131
  %133 = vmatprep.mubr.f32.mxu0 0.0
  %134 = vmatmul.mubr.f32.gmra.mxu0 %v52
  %v135 = vpop.f32.mrf.mxu0
  %v136 = vadd.f32 %v37, %v135
  %v137 = vpop.f32.mrf.mxu0
  %v138 = vadd.f32 %v37, %v137
  %139 = vmatprep.mubr.f32.mxu0 0.0
  %140 = vmatmul.mubr.f32.gmra.mxu0 %v55
  %v141 = vpop.f32.mrf.mxu0
  %v142 = vadd.f32 %v42, %v141
  %v143 = vpop.f32.mrf.mxu0
  %v144 = vadd.f32 %v42, %v143
  %145 = vdwg.mxu0
  %v146 = vmax.f32 %v124, 0.0
  %v147 = vmax.f32 %v126, 0.0
  %v148 = vmax.f32 %v130, 0.0
  %v149 = vmax.f32 %v132, 0.0
  %v150 = vmax.f32 %v136, 0.0
  %v151 = vmax.f32 %v138, 0.0
  %v152 = vmax.f32 %v142, 0.0
  %v153 = vmax.f32 %v144, 0.0
  %154 = vst [vmem:[%s3] sm:$0xff] %v146
  %155 = vst [vmem:[%s3 + $0x8] sm:$0xff] %v147
  %156 = vst [vmem:[%s3 + $0x10] sm:$0xff] %v148
  %157 = vst [vmem:[%s3 + $0x18] sm:$0xff] %v149
  %158 = vst [vmem:[%s3 + $0x20] sm:$0xff] %v150
  %159 = vst [vmem:[%s3 + $0x28] sm:$0xff] %v151
  %160 = vst [vmem:[%s3 + $0x30] sm:$0xff] %v152
  %161 = vst [vmem:[%s3 + $0x38] sm:$0xff] %v153
  %s162 = scalar_lea.vmem %s0, 16
  %v163 = vld [vmem:[%s162] sm:$0xff]
  %v164 = vld [vmem:[%s162 + $0x8] sm:$0xff]
  %165 = vmatprep.subr.mxu0 0.0
  %166 = vmatpush1.msra.mxu0 0.0
  %167 = vmatprep.subr.mxu0 0.0
  %168 = vmatpush1.msra.mxu0 0.0
  %169 = vmatprep.subr.mxu0 0.0
  %170 = vmatpush1.msra.mxu0 0.0
  %171 = vmatprep.subr.mxu0 0.0
  %172 = vmatpush1.msra.mxu0 0.0
  %173 = vmatprep.subr.mxu0 0.0
  %174 = vmatpush1.msra.mxu0 0.0
  %175 = vmatprep.subr.mxu0 0.0
  %176 = vmatpush1.msra.mxu0 0.0
  %177 = vmatprep.subr.mxu0 0.0
  %178 = vmatpush1.msra.mxu0 0.0
  %179 = vmatprep.subr.mxu0 0.0
  %180 = vmatpush1.msra.mxu0 0.0
  %181 = vmatprep.subr.mxu0 0.0
  %182 = vmatpush1.msra.mxu0 0.0
  %183 = vmatprep.subr.mxu0 0.0
  %184 = vmatpush1.msra.mxu0 0.0
  %185 = vmatprep.subr.mxu0 0.0
  %186 = vmatpush1.msra.mxu0 0.0
  %187 = vmatprep.subr.mxu0 0.0
  %188 = vmatpush1.msra.mxu0 0.0
  %189 = vmatprep.subr.mxu0 0.0
  %190 = vmatpush1.msra.mxu0 0.0
  %191 = vmatprep.subr.mxu0 0.0
  %192 = vmatpush1.msra.mxu0 0.0
  %193 = vmatprep.subr.mxu0 0.0
  %194 = vmatpush1.msra.mxu0 0.0
  %195 = vmatprep.subr.mxu0 %v164
  %196 = vmatpush1.msra.mxu0 %v163
  %197 = vmatprep.subr.mxu0 0.0
  %198 = vmatpush2.msra.mxu0 0.0
  %199 = vmatprep.subr.mxu0 0.0
  %200 = vmatpush2.msra.mxu0 0.0
  %201 = vmatprep.subr.mxu0 0.0
  %202 = vmatpush2.msra.mxu0 0.0
  %203 = vmatprep.subr.mxu0 0.0
  %204 = vmatpush2.msra.mxu0 0.0
  %205 = vmatprep.subr.mxu0 0.0
  %206 = vmatpush2.msra.mxu0 0.0
  %207 = vmatprep.subr.mxu0 0.0
  %208 = vmatpush2.msra.mxu0 0.0
  %209 = vmatprep.subr.mxu0 0.0
  %210 = vmatpush2.msra.mxu0 0.0
  %211 = vmatprep.subr.mxu0 0.0
  %212 = vmatpush2.msra.mxu0 0.0
  %213 = vmatprep.subr.mxu0 0.0
  %214 = vmatpush2.msra.mxu0 0.0
  %215 = vmatprep.subr.mxu0 0.0
  %216 = vmatpush2.msra.mxu0 0.0
  %217 = vmatprep.subr.mxu0 0.0
  %218 = vmatpush2.msra.mxu0 0.0
  %219 = vmatprep.subr.mxu0 0.0
  %220 = vmatpush2.msra.mxu0 0.0
  %221 = vmatprep.subr.mxu0 0.0
  %222 = vmatpush2.msra.mxu0 0.0
  %223 = vmatprep.subr.mxu0 0.0
  %224 = vmatpush2.msra.mxu0 0.0
  %225 = vmatprep.subr.mxu0 0.0
  %226 = vmatpush2.msra.mxu0 0.0
  %227 = vmatprep.subr.mxu0 0.0
  %228 = vmatpush2.msra.mxu0 0.0
  %229 = vmatprep.mubr.f32.mxu0 0.0
  %230 = vmatmul.mubr.f32.gmra.mxu0 %v46
  %v231 = vpop.f32.mrf.mxu0
  %v232 = vadd.f32 %v27, %v231
  %v233 = vpop.f32.mrf.mxu0
  %v234 = vadd.f32 %v27, %v233
  %235 = vmatprep.mubr.f32.mxu0 0.0
  %236 = vmatmul.mubr.f32.gmra.mxu0 %v49
  %v237 = vpop.f32.mrf.mxu0
  %v238 = vadd.f32 %v32, %v237
  %v239 = vpop.f32.mrf.mxu0
  %v240 = vadd.f32 %v32, %v239
  %241 = vmatprep.mubr.f32.mxu0 0.0
  %242 = vmatmul.mubr.f32.gmra.mxu0 %v52
  %v243 = vpop.f32.mrf.mxu0
  %v244 = vadd.f32 %v37, %v243
  %v245 = vpop.f32.mrf.mxu0
  %v246 = vadd.f32 %v37, %v245
  %247 = vmatprep.mubr.f32.mxu0 0.0
  %248 = vmatmul.mubr.f32.gmra.mxu0 %v55
  %v249 = vpop.f32.mrf.mxu0
  %v250 = vadd.f32 %v42, %v249
  %v251 = vpop.f32.mrf.mxu0
  %v252 = vadd.f32 %v42, %v251
  %253 = vdwg.mxu0
  %v254 = vmax.f32 %v232, 0.0
  %v255 = vmax.f32 %v234, 0.0
  %v256 = vmax.f32 %v238, 0.0
  %v257 = vmax.f32 %v240, 0.0
  %v258 = vmax.f32 %v244, 0.0
  %v259 = vmax.f32 %v246, 0.0
  %v260 = vmax.f32 %v250, 0.0
  %v261 = vmax.f32 %v252, 0.0
  %s262 = scalar_lea.vmem %s3, 64
  %263 = vst [vmem:[%s262] sm:$0xff] %v254
  %264 = vst [vmem:[%s262 + $0x8] sm:$0xff] %v255
  %265 = vst [vmem:[%s262 + $0x10] sm:$0xff] %v256
  %266 = vst [vmem:[%s262 + $0x18] sm:$0xff] %v257
  %267 = vst [vmem:[%s262 + $0x20] sm:$0xff] %v258
  %268 = vst [vmem:[%s262 + $0x28] sm:$0xff] %v259
  %269 = vst [vmem:[%s262 + $0x30] sm:$0xff] %v260
  %270 = vst [vmem:[%s262 + $0x38] sm:$0xff] %v261
  // Predicated region
  $region14: #{bottleneck_forward.3} parent=0 // pred_check
    _
  $region15: #{bottleneck_forward.3} parent=0 // pred_check_branch
    %272 = sbr.rel (0) target = $region17
  $region16: #{bottleneck_forward.3} parent=0 // pred_region
    _
  $region17: #{bottleneck_forward.3} parent=0 // pred_fallthru
    _
  // Predicated region
  $region18: #{bottleneck_forward.3} parent=0 // pred_check
    _
  $region19: #{bottleneck_forward.3} parent=0 // pred_check_branch
    %274 = sbr.rel (0) target = $region21
  $region20: #{bottleneck_forward.3} parent=0 // pred_region
    _
  $region21: #{bottleneck_forward.3} parent=0 // pred_fallthru
    _

</llo_original>
